<compile_context>
chip_gen: v5e
topology: v5e:2x2
jax: 0.10.0
libtpu: 0.0.40
codegen_flags: <defaults>
</compile_context>

<pallas_src>
import functools

import jax
import jax.numpy as jnp
import numpy as np
from jax.experimental import pallas as pl
from jax.experimental.pallas import tpu as pltpu


# ---------------------------------------------------------------------------
# pltpu.roll sign-convention probe (cached, one tiny device call per process).
# We need shifted[:, c] == x[:, (c + s) % n]; the probe determines which shift
# sign of pltpu.roll produces that.  (Review note: this is process-global and
# runs eagerly on first use; acceptable for single-process TPU usage.)
# ---------------------------------------------------------------------------
_ROLL_READS_FORWARD = None


def _roll_reads_forward():
    global _ROLL_READS_FORWARD
    if _ROLL_READS_FORWARD is None:
        def probe_kernel(x_ref, o_ref):
            o_ref[...] = pltpu.roll(x_ref[...], shift=1, axis=1)

        x = jnp.tile(jnp.arange(128, dtype=jnp.float32)[None, :], (8, 1))
        y = pl.pallas_call(
            probe_kernel,
            out_shape=jax.ShapeDtypeStruct((8, 128), jnp.float32),
        )(x)
        # forward-read convention: y[0, 0] == x[0, 1] == 1 ; jnp.roll-style: 127
        _ROLL_READS_FORWARD = bool(float(y[0, 0]) < 64.0)
    return _ROLL_READS_FORWARD


# ---------------------------------------------------------------------------
# in-kernel conv helpers (flat-frame layout [C, NLANE], NLANE = B_TILE * npad)
# ---------------------------------------------------------------------------
def _shift_cols(x, s, nlane, roll_forward):
    """y[:, c] == x[:, (c + s) % nlane]."""
    if s == 0:
        return x
    amt = (s if roll_forward else -s) % nlane
    return pltpu.roll(x, shift=amt, axis=1)


def _conv3x3_s1(xb, w_ref, wp, nlane, roll_forward):
    """3x3 / stride 1 / pad 1 conv, taps stacked on the contraction dim.

    xb:    [Cin, nlane] bf16, zero border & dead lanes per image block.
    w_ref: [Cout, 9*Cin] bf16.
    Returns [Cout, nlane] f32 (border/dead lanes garbage -> caller masks).
    """
    pieces = [_shift_cols(xb, di * wp + dj, nlane, roll_forward)
              for di in (-1, 0, 1) for dj in (-1, 0, 1)]
    xs = jnp.concatenate(pieces, axis=0)                  # [9*Cin, nlane]
    return jnp.dot(w_ref[...], xs, preferred_element_type=jnp.float32)


def _conv3x3_s2(ee, eo, oe, oo, w_ref, wp, nlane, roll_forward):
    """3x3 / stride 2 / pad 1 conv over the four parity sub-images of the
    conv input, each given as a flat frame of the *output* grid.  The weight
    may carry extra output rows (folded 1x1 shortcut) that only have nonzero
    columns at the centre tap (t=4 == unshifted ee)."""
    pieces = []
    for di in (-1, 0, 1):
        for dj in (-1, 0, 1):
            row_odd, rh = (False, 0) if di == 0 else (True, -1 if di < 0 else 0)
            col_odd, rw = (False, 0) if dj == 0 else (True, -1 if dj < 0 else 0)
            src = (oo if col_odd else oe) if row_odd else (eo if col_odd else ee)
            pieces.append(_shift_cols(src, rh * wp + rw, nlane, roll_forward))
    xs = jnp.concatenate(pieces, axis=0)                  # [9*Cin, nlane]
    return jnp.dot(w_ref[...], xs, preferred_element_type=jnp.float32)


def _parity_split(a_f32, p_ref, cin, btile, npad_src, npad_dst):
    """Stride-2 parity decomposition via a one-hot selection matmul.

    a_f32: [cin, btile*npad_src] masked activation (f32).
    p_ref: [npad_src, 4*npad_dst] bf16 one-hot selection matrix.
    Returns (ee, eo, oe, oo), each [cin, btile*npad_dst] bf16 with exact zero
    border / dead lanes."""
    ab = a_f32.astype(jnp.bfloat16)
    stack = jnp.concatenate(
        [ab[:, b * npad_src:(b + 1) * npad_src] for b in range(btile)], axis=0)
    par = jnp.dot(stack, p_ref[...], preferred_element_type=jnp.float32)
    par = par.astype(jnp.bfloat16)     # exact: one-hot selection of bf16 values
    frames = []
    for p in range(4):
        frames.append(jnp.concatenate(
            [par[b * cin:(b + 1) * cin, p * npad_dst:(p + 1) * npad_dst]
             for b in range(btile)], axis=1))
    return frames


# ---------------------------------------------------------------------------
# fully fused kernel: conv1 + layer1 + layer2 + layer3 + global avg pool
# ---------------------------------------------------------------------------
def _resnet_kernel(x_ref, m1_ref, m2_ref, m3_ref, pool_ref,
                   w0_ref, w1a_ref, w1b_ref,
                   p1_ref, w2m_ref, w2b_ref,
                   p2_ref, w3m_ref, w3b_ref,
                   o_ref, *, btile, wp1, npad1, wp2, npad2, wp3, npad3,
                   roll_forward):
    bf16 = jnp.bfloat16
    n1 = btile * npad1
    n2 = btile * npad2
    n3 = btile * npad3

    m1 = m1_ref[...]
    m2 = m2_ref[...]
    m3 = m3_ref[...]
    relu = lambda v: jnp.maximum(v, 0.0)

    # ---- stage 1: ResNet.conv1 + layer1 BasicBlock (stride 1, 3->16->16) ----
    x = x_ref[...]                                                  # bf16 [16, n1]
    a0 = relu(_conv3x3_s1(x, w0_ref, wp1, n1, roll_forward)) * m1   # f32 [16, n1]
    t = relu(_conv3x3_s1(a0.astype(bf16), w1a_ref, wp1, n1, roll_forward)) * m1
    h2 = _conv3x3_s1(t.astype(bf16), w1b_ref, wp1, n1, roll_forward)
    a1 = relu(h2 + a0) * m1                                         # f32 [16, n1]

    # ---- parity split H -> H/2 (in-kernel, one-hot MXU matmul) ----
    ee, eo, oe, oo = _parity_split(a1, p1_ref, 16, btile, npad1, npad2)

    # ---- stage 2: layer2 BasicBlock (stride 2, 16->32), shortcut folded ----
    pre = _conv3x3_s2(ee, eo, oe, oo, w2m_ref, wp2, n2, roll_forward)  # [64, n2]
    h = relu(pre[:32]) * m2
    sc = pre[32:64]                    # 1x1 stride-2 shortcut (no activation)
    h2 = _conv3x3_s1(h.astype(bf16), w2b_ref, wp2, n2, roll_forward)
    a2 = relu(h2 + sc) * m2                                         # f32 [32, n2]

    # ---- parity split H/2 -> H/4 ----
    ee3, eo3, oe3, oo3 = _parity_split(a2, p2_ref, 32, btile, npad2, npad3)

    # ---- stage 3: layer3 BasicBlock (stride 2, 32->64) + global avg pool ----
    pre3 = _conv3x3_s2(ee3, eo3, oe3, oo3, w3m_ref, wp3, n3, roll_forward)  # [128, n3]
    h = relu(pre3[:64]) * m3
    sc3 = pre3[64:128]
    h2 = _conv3x3_s1(h.astype(bf16), w3b_ref, wp3, n3, roll_forward)
    a3 = relu(h2 + sc3)                                             # f32 [64, n3]

    # Global average pool (F.avg_pool2d(out, out.size(3))) folded into one f32
    # matmul; the pooling matrix carries the interior mask and 1/HW, and lays
    # the batch tile out on lanes -> [64, btile].
    o_ref[...] = jnp.dot(a3, pool_ref[...], preferred_element_type=jnp.float32)


# ---------------------------------------------------------------------------
# host-side constant builders (all KB-scale, trace-time)
# ---------------------------------------------------------------------------
def _frame_geom(h, w):
    hp, wp = h + 2, w + 2
    nf = hp * wp
    npad = -(-nf // 128) * 128
    return wp, nf, npad


def _interior_mask(h, w, npad, btile):
    hp, wp = h + 2, w + 2
    m = np.zeros((1, npad), np.float32)
    for r in range(1, hp - 1):
        m[0, r * wp + 1:r * wp + wp - 1] = 1.0
    return np.tile(m, (1, btile))


def _parity_matrix(h, w, npad_src, npad_dst):
    """One-hot [npad_src, 4*npad_dst]: selects the 4 row/col parity sub-images
    of an h x w flat padded frame into flat padded frames of the h/2 x w/2
    grid (zeros everywhere else -> output border/dead lanes are exact zero)."""
    wp_s = w + 2
    wp_d = w // 2 + 2
    p = np.zeros((npad_src, 4 * npad_dst), np.float32)
    for pr in (0, 1):
        for pc in (0, 1):
            blk = (pr * 2 + pc) * npad_dst
            for ii in range(h // 2):
                for jj in range(w // 2):
                    src = (2 * ii + pr + 1) * wp_s + (2 * jj + pc + 1)
                    dst = (ii + 1) * wp_d + (jj + 1)
                    p[src, blk + dst] = 1.0
    return p


def _pool_matrix(h, w, npad, btile):
    """[btile*npad, btile] f32: per-image interior-lane average (mask + 1/HW)."""
    hp, wp = h + 2, w + 2
    inv = 1.0 / float(h * w)
    p = np.zeros((btile * npad, btile), np.float32)
    for b in range(btile):
        for r in range(1, hp - 1):
            for c in range(1, wp - 1):
                p[b * npad + r * wp + c, b] = inv
    return p


def _stack_taps(w, pad_cin_to=None):
    """[3, 3, Cin, Cout] HWIO -> [Cout, 9*Cin] bf16 (row-major (di, dj) taps
    on the contraction dimension, matching the stacked activation)."""
    if pad_cin_to is not None and w.shape[2] < pad_cin_to:
        w = jnp.pad(w, ((0, 0), (0, 0), (0, pad_cin_to - w.shape[2]), (0, 0)))
    kh, kw, cin, cout = w.shape
    return (jnp.transpose(w, (3, 0, 1, 2))
            .reshape(cout, kh * kw * cin).astype(jnp.bfloat16))


def _merge_shortcut(w3x3, wsc):
    """Fold the 1x1 stride-2 shortcut into the stride-2 conv's stacked weight:
    extra output rows that only multiply the unshifted even/even parity frame
    (tap index 4), zeros elsewhere.  -> [Cout1 + Cout2, 9*Cin] bf16."""
    conv = _stack_taps(w3x3)                         # [Cout1, 9*Cin]
    cin = wsc.shape[2]
    cout2 = wsc.shape[3]
    scrow = jnp.zeros((cout2, conv.shape[1]), jnp.bfloat16)
    scrow = scrow.at[:, 4 * cin:5 * cin].set(
        jnp.transpose(wsc[0, 0], (1, 0)).astype(jnp.bfloat16))
    return jnp.concatenate([conv, scrow], axis=0)


def _input_frames(x_nchw, npad1, btile):
    """NCHW f32 -> [nb, 16, btile*npad1] bf16 batch-tiled flat frames."""
    b, c, h, w = x_nchw.shape
    nb = -(-b // btile)
    bpad = nb * btile
    xp = jnp.pad(x_nchw.astype(jnp.float32),
                 ((0, bpad - b), (0, 16 - c), (1, 1), (1, 1)))
    xf = xp.reshape(bpad, 16, (h + 2) * (w + 2))
    xf = jnp.pad(xf, ((0, 0), (0, 0), (0, npad1 - xf.shape[-1])))
    xf = xf.reshape(nb, btile, 16, npad1).transpose(0, 2, 1, 3)
    return xf.reshape(nb, 16, btile * npad1).astype(jnp.bfloat16), nb, bpad


def _pick_btile(bsz, max_tile=8):
    """Batch-lane tile size; keeps grid >= 2 when possible (v7x: 2 TensorCores),
    and caps the per-step working set (well under VMEM on v5e/v6e/v7x)."""
    if bsz <= 1:
        return 1
    if bsz <= 2 * max_tile:
        return -(-bsz // 2)
    return max_tile


# ---------------------------------------------------------------------------
# forward
# ---------------------------------------------------------------------------
@functools.partial(jax.jit, static_argnames=("roll_forward", "flatten_output"))
def _resnet_forward(x_nchw, params, roll_forward, flatten_output=False):
    bsz, cin, h, w = x_nchw.shape
    assert cin == 3 and h == w and h % 4 == 0, "expects [B, 3, H, H], H % 4 == 0"

    btile = _pick_btile(bsz)
    wp1, _, npad1 = _frame_geom(h, w)
    wp2, _, npad2 = _frame_geom(h // 2, w // 2)
    wp3, _, npad3 = _frame_geom(h // 4, w // 4)

    x1, nb, bpad = _input_frames(x_nchw, npad1, btile)

    m1 = jnp.asarray(_interior_mask(h, w, npad1, btile))
    m2 = jnp.asarray(_interior_mask(h // 2, w // 2, npad2, btile))
    m3 = jnp.asarray(_interior_mask(h // 4, w // 4, npad3, btile))
    p1 = jnp.asarray(_parity_matrix(h, w, npad1, npad2)).astype(jnp.bfloat16)
    p2 = jnp.asarray(_parity_matrix(h // 2, w // 2, npad2, npad3)).astype(jnp.bfloat16)
    poolm = jnp.asarray(_pool_matrix(h // 4, w // 4, npad3, btile))

    w0 = _stack_taps(params["conv1"], pad_cin_to=16)      # [16, 144]
    w1a = _stack_taps(params["l1_conv1"])                 # [16, 144]
    w1b = _stack_taps(params["l1_conv2"])                 # [16, 144]
    w2m = _merge_shortcut(params["l2_conv1"], params["l2_shortcut"])  # [64, 144]
    w2b = _stack_taps(params["l2_conv2"])                 # [32, 288]
    w3m = _merge_shortcut(params["l3_conv1"], params["l3_shortcut"])  # [128, 288]
    w3b = _stack_taps(params["l3_conv2"])                 # [64, 576]

    def tile_spec(shape):
        nd = len(shape)
        return pl.BlockSpec((None,) + tuple(shape), lambda g: (g,) + (0,) * nd)

    def shared_spec(arr):
        nd = arr.ndim
        return pl.BlockSpec(arr.shape, lambda g: (0,) * nd)

    kern = functools.partial(
        _resnet_kernel, btile=btile, wp1=wp1, npad1=npad1, wp2=wp2,
        npad2=npad2, wp3=wp3, npad3=npad3, roll_forward=roll_forward)

    pooled = pl.pallas_call(
        kern,
        grid=(nb,),
        in_specs=[tile_spec((16, btile * npad1)),
                  shared_spec(m1), shared_spec(m2), shared_spec(m3),
                  shared_spec(poolm),
                  shared_spec(w0), shared_spec(w1a), shared_spec(w1b),
                  shared_spec(p1), shared_spec(w2m), shared_spec(w2b),
                  shared_spec(p2), shared_spec(w3m), shared_spec(w3b)],
        out_specs=tile_spec((64, btile)),
        out_shape=jax.ShapeDtypeStruct((nb, 64, btile), jnp.float32),
        compiler_params=pltpu.CompilerParams(
            dimension_semantics=("parallel",)),
    )(x1, m1, m2, m3, poolm, w0, w1a, w1b, p1, w2m, w2b, p2, w3m, w3b)

    out = pooled.transpose(0, 2, 1).reshape(bpad, 64)[:bsz]
    out = out.reshape(bsz, 64, 1, 1)          # == F.avg_pool2d(out, out.size(3))
    if flatten_output:
        out = out.reshape(bsz, -1, 64)
    return out


def resnet_forward(x_nchw, params, state=(), flatten_output=False):
    """Mirrors ResNet.forward(x, state) -> (out, state)."""
    out = _resnet_forward(x_nchw, params,
                          roll_forward=_roll_reads_forward(),
                          flatten_output=flatten_output)
    return out, state


# TODO(synk): set_parameters()/param_length (hypernetwork theta distribution,
# groups > 1) is parameter plumbing, not forward compute; only the groups=1
# forward path is implemented.  Deeper num_blocks would chain extra stride-1
# blocks inside the fused kernel; the realized config (1, 1, 1) is fused here.


# ---------------------------------------------------------------------------
# parameter init (variance_scaling fan_in, truncated normal -- module default)
# ---------------------------------------------------------------------------
def init_params(key):
    def conv_w(k, kh, kw, cin, cout):
        fan_in = kh * kw * cin
        std = (2.0 / fan_in) ** 0.5
        return std * jax.random.truncated_normal(
            k, -2.0, 2.0, (kh, kw, cin, cout), jnp.float32)

    ks = jax.random.split(key, 9)
    return {
        "conv1": conv_w(ks[0], 3, 3, 3, 16),
        "l1_conv1": conv_w(ks[1], 3, 3, 16, 16),
        "l1_conv2": conv_w(ks[2], 3, 3, 16, 16),
        "l2_conv1": conv_w(ks[3], 3, 3, 16, 32),
        "l2_conv2": conv_w(ks[4], 3, 3, 32, 32),
        "l2_shortcut": conv_w(ks[5], 1, 1, 16, 32),
        "l3_conv1": conv_w(ks[6], 3, 3, 32, 64),
        "l3_conv2": conv_w(ks[7], 3, 3, 64, 64),
        "l3_shortcut": conv_w(ks[8], 1, 1, 32, 64),
    }


def _reference_forward(x, params):
    """Pure-XLA reference (weights quantized to bf16 like the kernel)."""
    def q(w):
        return w.astype(jnp.bfloat16).astype(jnp.float32)

    def conv(v, w, stride, pad):
        return jax.lax.conv_general_dilated(
            v, q(w), window_strides=(stride, stride),
            padding=((pad, pad), (pad, pad)),
            dimension_numbers=("NCHW", "HWIO", "NCHW"))

    relu = lambda v: jnp.maximum(v, 0.0)
    h = relu(conv(x, params["conv1"], 1, 1))
    o = conv(relu(conv(h, params["l1_conv1"], 1, 1)), params["l1_conv2"], 1, 1)
    h = relu(o + h)
    o = conv(relu(conv(h, params["l2_conv1"], 2, 1)), params["l2_conv2"], 1, 1)
    h = relu(o + conv(h, params["l2_shortcut"], 2, 0))
    o = conv(relu(conv(h, params["l3_conv1"], 2, 1)), params["l3_conv2"], 1, 1)
    h = relu(o + conv(h, params["l3_shortcut"], 2, 0))
    return jnp.mean(h, axis=(2, 3), keepdims=True)


if __name__ == "__main__":
    key = jax.random.PRNGKey(0)
    kp, kx = jax.random.split(key)
    params = init_params(kp)
    # batch=8 -> B_TILE=4, grid=(2,) (exercises batch-lane tiling + 2-TC split)
    x = jax.random.normal(kx, (8, 3, 16, 16), jnp.float32)  # NCHW like PyTorch

    out, state = resnet_forward(x, params)
    out = jax.block_until_ready(out)

    assert out.shape == (8, 64, 1, 1), out.shape
    assert out.dtype == jnp.float32

    # Numerical check against a pure-XLA reference (kernel uses bf16 matmul
    # inputs with f32 accumulation -> loose tolerance).
    ref = _reference_forward(x, params)
    err = float(jnp.max(jnp.abs(out - ref)))
    scale = float(jnp.max(jnp.abs(ref)))
    assert err <= 0.08 * scale + 1e-3, (err, scale)

    print("KERNEL_OK")
</pallas_src>

<mosaic_0001>
module attributes {stable_mosaic.version = 11 : i64} {
  func.func @probe_kernel(%arg0: memref<8x128xf32, #tpu.memory_space<vmem>>, %arg1: memref<8x128xf32, #tpu.memory_space<vmem>>) attributes {dimension_semantics = [], scalar_prefetch = 0 : i64, scratch_operands = 0 : i64, tpu.core_type = #tpu.core_type<tc>} {
    %c0 = arith.constant 0 : index
    %c0_0 = arith.constant 0 : index
    %0 = vector.load %arg0[%c0, %c0_0] : memref<8x128xf32, #tpu.memory_space<vmem>>, vector<8x128xf32>
    %c1_i32 = arith.constant 1 : i32
    %1 = tpu.dynamic_rotate %0 by %c1_i32 dim 1 : vector<8x128xf32>, i32 -> vector<8x128xf32>
    %c0_1 = arith.constant 0 : index
    %c0_2 = arith.constant 0 : index
    %2 = vector.load %arg1[%c0_1, %c0_2] : memref<8x128xf32, #tpu.memory_space<vmem>>, vector<8x128xf32>
    tpu.vector_store %arg1[%c0_1, %c0_2], %1 {strides = array<i32>} : memref<8x128xf32, #tpu.memory_space<vmem>>, vector<8x128xf32>,
    return
  }
}

</mosaic_0001>

<llo_original>
// kernel: tpu_custom_call.1
$region0: #{tpu_custom_call.1}
  #allocation0 [shape = 'u32[]', space=smem, size = 0x4, offset = 0x4, fixed_abs, tag = 'smem constant byte address 0x4 - core index']
  #allocation1 [shape = 'u32[72,128]{1,0:T(1,128)}', space=vmem, size = 0x9000, scoped, tag = 'internal scratch']
  %s0 = inlined_call_operand.hbm [shape: f32[8,128], index: 0, kind: input, shape index: {}]
  %s1 = inlined_call_operand.hbm [shape: f32[8,128], index: 1, kind: output, shape index: {}]
  %s2 = sld [smem:[#allocation0]]
  $region18: #{tpu_custom_call.1} parent=0
    _
  %s4 = ssub.s32 1, %s2
  %s5 = scalar_select 0, %s4, %s2
  $region1: #{tpu_custom_call.1} parent=0
    #allocation2 [shape = 'u8[4096]{0}', space=vmem, size = 0x1000, scoped, tag = 'input window, operand 0, single buffered']
    #allocation3 [shape = 's32[1]{0}', space=sflag, size = 0x4, scoped, tag = 'scoped memory for tpu_custom_call.1']
    #allocation4 [shape = 's32[1]{0}', space=sflag, size = 0x4, scoped, tag = 'scoped memory for tpu_custom_call.1']
    #allocation5 [shape = 'u8[4096]{0}', space=vmem, size = 0x1000, scoped, tag = 'output window, operand 0, single buffered']
    %6 = vsyncpa [#allocation3], 0
    %7 = vsyncpa [#allocation4], 0
    // Predicated region
    $region2: #{tpu_custom_call.1} parent=1 // pred_check
      _
    $region3: #{tpu_custom_call.1} parent=1 // pred_check_branch
      %9 = sbr.rel (0) target = $region5
    $region4: #{tpu_custom_call.1} parent=1 // pred_region
      %11 = vsyncadd [#allocation3], 0
      %s13 = sshll.u32 %s0, 4
      %s14 = int_to_ptr.hbm [resolvable:$true] %s13
      %s15 = sshll.u32 [#allocation2], 4
      %s16 = int_to_ptr.vmem [resolvable:$true] %s15
      %18 = dma.hbm_to_vmem [thread:$0]  %s14, 128, %s16, [#allocation3]
    $region5: #{tpu_custom_call.1} parent=1 // pred_fallthru
      _
    // Predicated region
    $region6: #{tpu_custom_call.1} parent=1 // pred_check
      _
    $region7: #{tpu_custom_call.1} parent=1 // pred_check_branch
      %20 = sbr.rel (0) target = $region9
    $region8: #{tpu_custom_call.1} parent=1 // pred_region
      %22 = dma.done [#allocation3], 128
    $region9: #{tpu_custom_call.1} parent=1 // pred_fallthru
      _
    %v23 = vld [vmem:[#allocation2] sm:$0xff]
    %24 = vrot.lane.b32.xlu0 %v23, 1
    %v25 = vpop.permute.xlu0 %24
    %26 = vst [vmem:[#allocation5] sm:$0xff] %v25
    // Predicated region
    $region10: #{tpu_custom_call.1} parent=1 // pred_check
      _
    $region11: #{tpu_custom_call.1} parent=1 // pred_check_branch
      %28 = sbr.rel (0) target = $region13
    $region12: #{tpu_custom_call.1} parent=1 // pred_region
      %30 = vsyncadd [#allocation4], 0
      %s32 = sshll.u32 [#allocation5], 4
      %s33 = int_to_ptr.vmem [resolvable:$true] %s32
      %s34 = sshll.u32 %s1, 4
      %s35 = int_to_ptr.hbm [resolvable:$true] %s34
      %37 = dma.vmem_to_hbm [thread:$0]  %s33, 128, %s35, [#allocation4]
    $region13: #{tpu_custom_call.1} parent=1 // pred_fallthru
      _
    // Predicated region
    $region14: #{tpu_custom_call.1} parent=1 // pred_check
      _
    $region15: #{tpu_custom_call.1} parent=1 // pred_check_branch
      %39 = sbr.rel (0) target = $region17
    $region16: #{tpu_custom_call.1} parent=1 // pred_region
      %41 = dma.done [#allocation4], 128
    $region17: #{tpu_custom_call.1} parent=1 // pred_fallthru
      _
    %42 = vsyncpa [#allocation3], 1
    %43 = vsyncpa [#allocation4], 1

</llo_original>
